<compile_context>
chip_gen: v7x
topology: tpu7x:2x2x1
jax: 0.10.0
libtpu: 0.0.40
codegen_flags: <defaults>
</compile_context>

<pallas_src>
import functools

import jax
import jax.numpy as jnp
from jax import lax
from jax.experimental import pallas as pl
from jax.experimental.pallas import tpu as pltpu

ALPHA = 1.0   # PyTorch module defaults (alpha=1, gamma=2, reduction='mean')
GAMMA = 2.0


def _focal_loss_kernel(x_ref, t_ref, o_ref, *, alpha, gamma, total_rows,
                       block_b, need_row_mask):
    x = x_ref[...].astype(jnp.float32)
    t = t_ref[...].astype(jnp.float32)

    # One shared transcendental: e = exp(-|x|).
    e = jnp.exp(-jnp.abs(x))

    # Numerically stable BCE-with-logits (reduction='none'):
    #   max(x, 0) - x*t + log(1 + exp(-|x|))
    bce = jnp.maximum(x, 0.0) - x * t + jnp.log1p(e)

    # Sigmoid from the same e, denominator via approximate EUP reciprocal
    # (removes the exact-divide Newton steps from the VALU slot):
    #   x >= 0:  p = 1 / (1 + e)        x < 0:  p = e / (1 + e)
    p = jnp.where(x >= 0.0, 1.0, e) * pl.reciprocal(1.0 + e, approx=True)

    # 1 - p_t = 1 - (p*t + (1-p)*(1-t)) = t + p - 2*p*t   (exact, VPU only)
    one_m_pt = t + p - 2.0 * p * t
    if gamma == 2.0:
        fw = one_m_pt * one_m_pt              # explicit square, no pow
    elif gamma == 1.0:
        fw = one_m_pt
    elif gamma == 0.0:
        fw = jnp.ones_like(one_m_pt)
    else:
        fw = one_m_pt ** gamma                # generic fallback (exp+log)

    # alpha_t specializations for the common configurations.
    if alpha == 1.0:
        focal = t * fw * bce                  # alpha_t == t
    elif alpha == 0.5:
        focal = 0.5 * fw * bce                # alpha_t == 0.5
    else:
        alpha_t = alpha * t + (1.0 - alpha) * (1.0 - t)
        focal = alpha_t * fw * bce

    if need_row_mask:
        i = pl.program_id(0)
        is_tail = i == pl.num_programs(0) - 1

        @pl.when(is_tail)
        def _():
            # Only the last batch tile pays for the iota + select: padded rows
            # (possibly garbage / NaN from the OOB block read) are zeroed
            # before the column reduction.  Padded *columns* never reach the
            # output (out-of-bounds output stores are dropped), so no column
            # mask is required.
            row = lax.broadcasted_iota(jnp.int32, focal.shape, 0) + i * block_b
            masked = jnp.where(row < total_rows, focal, 0.0)
            o_ref[...] = jnp.sum(masked, axis=0).reshape(o_ref.shape)

        @pl.when(jnp.logical_not(is_tail))
        def _():
            o_ref[...] = jnp.sum(focal, axis=0).reshape(o_ref.shape)
    else:
        o_ref[...] = jnp.sum(focal, axis=0).reshape(o_ref.shape)


def _round_up(x, m):
    return ((x + m - 1) // m) * m


def _sublane_pack(itemsize):
    # Minimum sublane packing per dtype width: f32 -> 8, bf16 -> 16, int8 -> 32.
    return {4: 8, 2: 16, 1: 32}.get(int(itemsize), 8)


def _choose_block_c(C):
    """Lane tile: full C when it fits, else a 128-aligned 2048-lane tile so
    VMEM stays bounded for arbitrarily large class counts."""
    max_c = 2048
    return int(C) if C <= max_c else max_c


def _choose_block_b(B, block_c, itemsize_x, itemsize_t):
    """Batch tile: as large as an ~8 MiB double-buffered-input budget allows
    (safe on every generation, incl. v7x's 64 MiB VMEM), aligned to the
    dtypes' sublane packing, and capped so the batch grid has >= 2 tiles
    whenever B allows (both v7x TensorCores get work)."""
    pack = max(_sublane_pack(itemsize_x), _sublane_pack(itemsize_t))
    vmem_budget = 8 * 1024 * 1024                        # bytes, inputs only
    per_row = 2 * block_c * (itemsize_x + itemsize_t)    # 2 pipeline buffers
    bb = min(2048, max(pack, vmem_budget // per_row))
    bb = max(pack, (bb // pack) * pack)                  # sublane-pack aligned
    two_tile_cap = _round_up(pl.cdiv(B, 2), pack)        # >= 2 batch tiles
    bb = min(bb, two_tile_cap)
    return int(bb)


def focal_loss(inputs, targets, *, alpha=ALPHA, gamma=GAMMA, reduction="mean",
               block_b=None, block_c=None):
    """Sigmoid focal loss. inputs/targets: (B, C); f32 or bf16 logits and
    f32/bf16 targets are accepted as-is (math is f32 inside the kernel)."""
    B, C = inputs.shape
    assert targets.shape == (B, C)

    itemsize_x = jnp.dtype(inputs.dtype).itemsize
    itemsize_t = jnp.dtype(targets.dtype).itemsize

    if block_c is None:
        block_c = _choose_block_c(C)
    if block_b is None:
        block_b = _choose_block_b(B, block_c, itemsize_x, itemsize_t)

    num_i = int(pl.cdiv(B, block_b))
    num_j = int(pl.cdiv(C, block_c))
    need_row_mask = (num_i * block_b) != B

    kernel = functools.partial(
        _focal_loss_kernel,
        alpha=float(alpha),
        gamma=float(gamma),
        total_rows=B,
        block_b=block_b,
        need_row_mask=need_row_mask,
    )

    partials = pl.pallas_call(
        kernel,
        out_shape=jax.ShapeDtypeStruct((num_i, 1, C), jnp.float32),
        grid_spec=pltpu.PrefetchScalarGridSpec(
            num_scalar_prefetch=0,
            grid=(num_i, num_j),
            in_specs=[
                pl.BlockSpec((block_b, block_c), lambda i, j: (i, j)),
                pl.BlockSpec((block_b, block_c), lambda i, j: (i, j)),
            ],
            out_specs=pl.BlockSpec((1, 1, block_c), lambda i, j: (i, 0, j)),
        ),
        compiler_params=pltpu.CompilerParams(
            # Every (i, j) tile writes its own partial -> fully parallel grid
            # (megacore-shardable on v7x; harmless on v5e/v6e).
            dimension_semantics=("parallel", "parallel"),
            vmem_limit_bytes=32 * 1024 * 1024,
        ),
    )(inputs, targets)

    total = jnp.sum(partials)
    if reduction == "mean":
        return total / jnp.float32(B * C)
    elif reduction == "sum":
        return total
    else:
        # TODO(synk): reduction='none' (per-element map output) not implemented;
        # the module's default ('mean') and 'sum' are supported.
        raise NotImplementedError("reduction='none' not implemented")


def _focal_loss_ref(inputs, targets, alpha=ALPHA, gamma=GAMMA):
    x = inputs.astype(jnp.float32)
    t = targets.astype(jnp.float32)
    p = jax.nn.sigmoid(x)
    bce = jnp.maximum(x, 0.0) - x * t + jnp.log1p(jnp.exp(-jnp.abs(x)))
    p_t = p * t + (1.0 - p) * (1.0 - t)
    fw = (1.0 - p_t) ** gamma
    a_t = alpha * t + (1.0 - alpha) * (1.0 - t)
    return jnp.mean(a_t * fw * bce)


if __name__ == "__main__":
    key = jax.random.PRNGKey(0)
    k1, k2, k3, k4, k5 = jax.random.split(key, 5)

    # Small multi-label classification problem: (batch, num_classes) logits.
    B, C = 16, 128
    logits = jax.random.normal(k1, (B, C), dtype=jnp.float32) * 2.0
    targets = jax.random.bernoulli(k2, 0.3, (B, C)).astype(jnp.float32)

    out = jax.block_until_ready(focal_loss(logits, targets))
    ref = _focal_loss_ref(logits, targets)
    # rtol accounts for the approximate EUP reciprocal (~2^-12 rel error in p).
    assert jnp.allclose(out, ref, rtol=2e-3, atol=1e-6), (out, ref)

    # Ragged batch (not a multiple of the sublane width) exercises the
    # pl.when-gated tail-mask path and the 2-tile batch grid.
    B2, C2 = 11, 128
    logits2 = jax.random.normal(k3, (B2, C2), dtype=jnp.float32) * 2.0
    targets2 = jax.random.bernoulli(k4, 0.3, (B2, C2)).astype(jnp.float32)

    out2 = jax.block_until_ready(focal_loss(logits2, targets2))
    ref2 = _focal_loss_ref(logits2, targets2)
    assert jnp.allclose(out2, ref2, rtol=2e-3, atol=1e-6), (out2, ref2)

    # bf16 logits accepted end-to-end (no wrapper-side upcast / extra HBM pass).
    logits3 = (jax.random.normal(k5, (B, C), dtype=jnp.float32) * 2.0
               ).astype(jnp.bfloat16)
    out3 = jax.block_until_ready(focal_loss(logits3, targets))
    ref3 = _focal_loss_ref(logits3, targets)
    assert jnp.allclose(out3, ref3, rtol=2e-2, atol=1e-5), (out3, ref3)

    print("KERNEL_OK")
</pallas_src>

<mosaic_0001>
module attributes {stable_mosaic.version = 11 : i64} {
  func.func @_focal_loss_kernel(%arg0: i32, %arg1: i32, %arg2: memref<8x128xf32, #tpu.memory_space<vmem>>, %arg3: memref<8x128xf32, #tpu.memory_space<vmem>>, %arg4: memref<1x1x128xf32, #tpu.memory_space<vmem>>) attributes {dimension_semantics = [#tpu.dimension_semantics<parallel>, #tpu.dimension_semantics<parallel>], iteration_bounds = array<i64: 2, 1>, scalar_prefetch = 0 : i64, scratch_operands = 0 : i64, tpu.core_type = #tpu.core_type<tc>, window_params = [{transform_indices = @transform_0, window_bounds = array<i64: 8, 128>}, {transform_indices = @transform_1, window_bounds = array<i64: 8, 128>}, {transform_indices = @transform_2, window_bounds = array<i64: 1, 1, 128>}]} {
    %c0 = arith.constant 0 : index
    %c0_0 = arith.constant 0 : index
    %0 = vector.load %arg2[%c0, %c0_0] : memref<8x128xf32, #tpu.memory_space<vmem>>, vector<8x128xf32>
    %c0_1 = arith.constant 0 : index
    %c0_2 = arith.constant 0 : index
    %1 = vector.load %arg3[%c0_1, %c0_2] : memref<8x128xf32, #tpu.memory_space<vmem>>, vector<8x128xf32>
    %2 = math.absf %0 : vector<8x128xf32>
    %cst = arith.constant 0.000000e+00 : f32
    %3 = vector.broadcast %cst : f32 to vector<8x128xf32>
    %4 = arith.subf %3, %2 : vector<8x128xf32>
    %5 = math.exp %4 : vector<8x128xf32>
    %cst_3 = arith.constant 0.000000e+00 : f32
    %6 = vector.broadcast %cst_3 : f32 to vector<8x128xf32>
    %7 = arith.maximumf %0, %6 : vector<8x128xf32>
    %8 = arith.mulf %0, %1 : vector<8x128xf32>
    %9 = arith.subf %7, %8 : vector<8x128xf32>
    %10 = math.log1p %5 : vector<8x128xf32>
    %11 = arith.addf %9, %10 : vector<8x128xf32>
    %cst_4 = arith.constant 0.000000e+00 : f32
    %12 = vector.broadcast %cst_4 : f32 to vector<8x128xf32>
    %13 = arith.cmpf oge, %0, %12 : vector<8x128xf32>
    %cst_5 = arith.constant 1.000000e+00 : f32
    %14 = vector.broadcast %cst_5 : f32 to vector<8x128xf32>
    %15 = arith.select %13, %14, %5 : vector<8x128xi1>, vector<8x128xf32>
    %cst_6 = arith.constant 1.000000e+00 : f32
    %16 = vector.broadcast %cst_6 : f32 to vector<8x128xf32>
    %17 = arith.addf %16, %5 : vector<8x128xf32>
    %18 = tpu.reciprocal %17 {approx = true} : vector<8x128xf32> -> vector<8x128xf32>
    %19 = arith.mulf %15, %18 : vector<8x128xf32>
    %20 = arith.addf %1, %19 : vector<8x128xf32>
    %cst_7 = arith.constant 2.000000e+00 : f32
    %21 = vector.broadcast %cst_7 : f32 to vector<8x128xf32>
    %22 = arith.mulf %21, %19 : vector<8x128xf32>
    %23 = arith.mulf %22, %1 : vector<8x128xf32>
    %24 = arith.subf %20, %23 : vector<8x128xf32>
    %25 = arith.mulf %24, %24 : vector<8x128xf32>
    %26 = arith.mulf %1, %25 : vector<8x128xf32>
    %27 = arith.mulf %26, %11 : vector<8x128xf32>
    %cst_8 = arith.constant dense<0.000000e+00> : vector<128xf32>
    %28 = vector.multi_reduction <add>, %27, %cst_8 [0] : vector<8x128xf32> to vector<128xf32>
    %29 = vector.shape_cast %28 : vector<128xf32> to vector<1x1x128xf32>
    %c0_9 = arith.constant 0 : index
    %c0_10 = arith.constant 0 : index
    %c0_11 = arith.constant 0 : index
    %30 = vector.load %arg4[%c0_9, %c0_10, %c0_11] : memref<1x1x128xf32, #tpu.memory_space<vmem>>, vector<1x1x128xf32>
    tpu.vector_store %arg4[%c0_9, %c0_10, %c0_11], %29 {strides = array<i32>} : memref<1x1x128xf32, #tpu.memory_space<vmem>>, vector<1x1x128xf32>,
    return
  }
  func.func @transform_0(%arg0: i32, %arg1: i32) -> (i32, i32) {
    %c0_i32 = arith.constant 0 : i32
    return %arg0, %arg1 : i32, i32
  }
  func.func @transform_1(%arg0: i32, %arg1: i32) -> (i32, i32) {
    %c0_i32 = arith.constant 0 : i32
    return %arg0, %arg1 : i32, i32
  }
  func.func @transform_2(%arg0: i32, %arg1: i32) -> (i32, i32, i32) {
    %c0_i32 = arith.constant 0 : i32
    %c0_i32_0 = arith.constant 0 : i32
    return %arg0, %c0_i32, %arg1 : i32, i32, i32
  }
}

</mosaic_0001>

<llo_original>
// kernel: tpu_custom_call.1
$region0: #{tpu_custom_call.1}
  #allocation0 [shape = 'u32[]', space=smem, size = 0x4, offset = 0x4, fixed_abs, tag = 'smem constant byte address 0x4 - core index']
  #allocation1 [shape = 'u32[144,128]{1,0:T(1,128)}', space=vmem, size = 0x12000, scoped, tag = 'internal scratch']
  %s0 = inlined_call_operand.hbm [shape: f32[16,128], index: 0, kind: input, shape index: {}]
  %s1 = inlined_call_operand.hbm [shape: f32[16,128], index: 1, kind: input, shape index: {}]
  %s2 = inlined_call_operand.hbm [shape: f32[2,1,128], index: 2, kind: output, shape index: {}]
  %s3 = sld [smem:[#allocation0]]
  $region49: #{tpu_custom_call.1} parent=0
    _
  %s5 = ssub.s32 1, %s3
  %s6 = scalar_select 0, %s5, %s3
  $region1: #{tpu_custom_call.1} parent=0
    #allocation2 [shape = 'u8[8192]{0}', space=vmem, size = 0x2000, scoped, tag = 'input window, operand 0']
    #allocation3 [shape = 's32[2]{0}', space=sflag, size = 0x8, scoped, tag = 'scoped memory for tpu_custom_call.1']
    #allocation4 [shape = 's32[2]{0}', space=sflag, size = 0x8, scoped, tag = 'scoped memory for tpu_custom_call.1']
    #allocation5 [shape = 'u8[8192]{0}', space=vmem, size = 0x2000, scoped, tag = 'input window, operand 1']
    #allocation6 [shape = 's32[2]{0}', space=sflag, size = 0x8, scoped, tag = 'scoped memory for tpu_custom_call.1']
    #allocation7 [shape = 'u8[1024]{0}', space=vmem, size = 0x400, scoped, tag = 'output window, operand 0']
    %7 = vsyncpa [#allocation3], 0
    %s8 = scalar_lea.sflag [#allocation3], 1
    %9 = vsyncpa %s8, 0
    %10 = vsyncpa [#allocation6], 0
    %s11 = scalar_lea.sflag [#allocation6], 1
    %12 = vsyncpa %s11, 0
    %13 = vsyncpa [#allocation4], 0
    %s14 = scalar_lea.sflag [#allocation4], 1
    %15 = vsyncpa %s14, 0
    loop: start=0, step=1, limit=4
    $region2: #{tpu_custom_call.1} parent=1 // loop_pre_header
      _
    $region3: #{tpu_custom_call.1} parent=1 // loop_header
      %s17 = sphi 0, %s21
      %p18 = scmp.ge.s32.totalorder %s17, 4
      %s24 = sphi 0, %s36
      %s25 = sphi 0, %s32
      %s26 = sphi 0, %s24
      %s27 = sphi 0, %s25
      %s28 = sphi 0, %s26
      %s29 = sphi 0, %s27
      %s41 = sphi 0, %s43
      %s44 = sphi 0, %s41
      %s45 = sphi 0, %s44
      %s61 = sphi 0, %s45
      %s69 = sphi 0, %s71
      %s72 = sphi 0, %s69
      %s73 = sphi 0, %s72
      %s89 = sphi 0, %s73
      %s97 = sphi 0, %s99
      %s100 = sphi 0, %s97
      %s101 = sphi 0, %s100
      %s117 = sphi 0, %s101
    $region4: #{tpu_custom_call.1} parent=1 // loop_header_branch
      %20 = sbr.rel (%p18) target = $region8
    $region5: #{tpu_custom_call.1} parent=1 // loop_body
      %s22 = ssub.s32 %s17, 1
      %s23 = ssub.s32 %s17, 2
      %s30 = sadd.s32 1, %s25
      %p31 = scmp.ge.s32.totalorder %s30, 1
      %s32 = scalar_select %p31, 0, %s30
      %s33 = sadd.s32 1, %s24
      %s34 = scalar_select %p31, %s33, %s24
      %p35 = scmp.ge.s32.totalorder %s34, 2
      %s36 = scalar_select %p35, 0, %s34
      %s37 = ssub.s32 %s24, %s36
      %s38 = ssub.s32 %s25, %s32
      %s39 = sor.u32 %s37, %s38
      %p40 = scmp.eq.s32.totalorder %s39, 0
      %s42 = sadd.s32 %s41, 1
      %s43 = scalar_select %p40, %s41, %s42
      %p46 = pneg %p40
      %p47 = scmp.eq.s32.totalorder %s17, 1
      %p48 = por %p46, %p47
      %p49 = scmp.ne.s32.totalorder %s41, %s44
      %p50 = scmp.eq.s32.totalorder %s17, 0
      %p51 = por %p49, %p50
      %p52 = scmp.ne.s32.totalorder %s41, %s44
      %p53 = scmp.eq.s32.totalorder %s22, 1
      %p54 = por %p52, %p53
      %p55 = scmp.ne.s32.totalorder %s44, %s45
      %p56 = scmp.eq.s32.totalorder %s22, 0
      %p57 = por %p55, %p56
      %p58 = scmp.ne.s32.totalorder %s44, %s45
      %p59 = scmp.eq.s32.totalorder %s23, 1
      %p60 = por %p58, %p59
      %p62 = scmp.ne.s32.totalorder %s45, %s61
      %p63 = scmp.eq.s32.totalorder %s23, 0
      %p64 = por %p62, %p63
      %s65 = ssub.s32 %s24, %s36
      %s66 = ssub.s32 %s25, %s32
      %s67 = sor.u32 %s65, %s66
      %p68 = scmp.eq.s32.totalorder %s67, 0
      %s70 = sadd.s32 %s69, 1
      %s71 = scalar_select %p68, %s69, %s70
      %p74 = pneg %p68
      %p75 = scmp.eq.s32.totalorder %s17, 1
      %p76 = por %p74, %p75
      %p77 = scmp.ne.s32.totalorder %s69, %s72
      %p78 = scmp.eq.s32.totalorder %s17, 0
      %p79 = por %p77, %p78
      %p80 = scmp.ne.s32.totalorder %s69, %s72
      %p81 = scmp.eq.s32.totalorder %s22, 1
      %p82 = por %p80, %p81
      %p83 = scmp.ne.s32.totalorder %s72, %s73
      %p84 = scmp.eq.s32.totalorder %s22, 0
      %p85 = por %p83, %p84
      %p86 = scmp.ne.s32.totalorder %s72, %s73
      %p87 = scmp.eq.s32.totalorder %s23, 1
      %p88 = por %p86, %p87
      %p90 = scmp.ne.s32.totalorder %s73, %s89
      %p91 = scmp.eq.s32.totalorder %s23, 0
      %p92 = por %p90, %p91
      %s93 = ssub.s32 %s24, %s36
      %s94 = ssub.s32 %s25, %s32
      %s95 = sor.u32 %s93, %s94
      %p96 = scmp.eq.s32.totalorder %s95, 0
      %s98 = sadd.s32 %s97, 1
      %s99 = scalar_select %p96, %s97, %s98
      %p102 = pneg %p96
      %p103 = scmp.eq.s32.totalorder %s17, 1
      %p104 = por %p102, %p103
      %p105 = scmp.ne.s32.totalorder %s97, %s100
      %p106 = scmp.eq.s32.totalorder %s17, 0
      %p107 = por %p105, %p106
      %p108 = scmp.ne.s32.totalorder %s97, %s100
      %p109 = scmp.eq.s32.totalorder %s22, 1
      %p110 = por %p108, %p109
      %p111 = scmp.ne.s32.totalorder %s100, %s101
      %p112 = scmp.eq.s32.totalorder %s22, 0
      %p113 = por %p111, %p112
      %p114 = scmp.ne.s32.totalorder %s100, %s101
      %p115 = scmp.eq.s32.totalorder %s23, 1
      %p116 = por %p114, %p115
      %p118 = scmp.ne.s32.totalorder %s101, %s117
      %p119 = scmp.eq.s32.totalorder %s23, 0
      %p120 = por %p118, %p119
      %p121 = scmp.le.s32.totalorder 1, %s17
      %p122 = scmp.lt.s32.totalorder %s17, 3
      %p123 = pnand %p121, %p122
      %p124 = pneg %p123
      // Predicated region
      $region9: #{tpu_custom_call.1} parent=5 // pred_check
        _
      $region10: #{tpu_custom_call.1} parent=5 // pred_check_branch
        %126 = sbr.rel (%p123) target = $region12
      $region11: #{tpu_custom_call.1} parent=5 // pred_region
        %s127 = ssub.s32 %s17, 1
      $region12: #{tpu_custom_call.1} parent=5 // pred_fallthru
        _
      %p128 = scmp.lt.s32.totalorder %s17, 2
      // Predicated region
      $region13: #{tpu_custom_call.1} parent=5 // pred_check
        %p129 = pneg %p128
      $region14: #{tpu_custom_call.1} parent=5 // pred_check_branch
        %131 = sbr.rel (%p129) target = $region16
      $region15: #{tpu_custom_call.1} parent=5 // pred_region
        // Predicated region
        $region17: #{tpu_custom_call.1} parent=15 // pred_check
          %p132 = pneg %p51
        $region18: #{tpu_custom_call.1} parent=15 // pred_check_branch
          %134 = sbr.rel (%p132) target = $region20
        $region19: #{tpu_custom_call.1} parent=15 // pred_region
          %s135 = sand.u32 %s41, 1
          %s136 = scalar_lea.sflag [#allocation3], %s135
          %s137 = sand.u32 %s41, 1
          %s138 = smul.addr %s137, 8
          %s139 = scalar_lea.vmem [#allocation2], %s138
          %s141 = ssub.s32 128, 128
          %142 = vsyncadd %s136, %s141
          %s143 = sadd.s32 %s25, %s24
          %s144 = smul.addr %s143, 128
          %s145 = scalar_lea.hbm %s0, %s144
          %s147 = sshll.u32 %s139, 4
          %s148 = int_to_ptr.vmem [resolvable:$true] %s147
          %150 = dma.hbm_to_vmem [thread:$0]  %s145, 128, %s148, %s136
        $region20: #{tpu_custom_call.1} parent=15 // pred_fallthru
          _
        // Predicated region
        $region21: #{tpu_custom_call.1} parent=15 // pred_check
          %p151 = pneg %p79
        $region22: #{tpu_custom_call.1} parent=15 // pred_check_branch
          %153 = sbr.rel (%p151) target = $region24
        $region23: #{tpu_custom_call.1} parent=15 // pred_region
          %s154 = sand.u32 %s69, 1
          %s155 = scalar_lea.sflag [#allocation6], %s154
          %s156 = sand.u32 %s69, 1
          %s157 = smul.addr %s156, 8
          %s158 = scalar_lea.vmem [#allocation5], %s157
          %s160 = ssub.s32 128, 128
          %161 = vsyncadd %s155, %s160
          %s162 = sadd.s32 %s25, %s24
          %s163 = smul.addr %s162, 128
          %s164 = scalar_lea.hbm %s1, %s163
          %s166 = sshll.u32 %s158, 4
          %s167 = int_to_ptr.vmem [resolvable:$true] %s166
          %169 = dma.hbm_to_vmem [thread:$0]  %s164, 128, %s167, %s155
        $region24: #{tpu_custom_call.1} parent=15 // pred_fallthru
          _
      $region16: #{tpu_custom_call.1} parent=5 // pred_fallthru
        _
      %p170 = scmp.le.s32.totalorder 1, %s17
      %p171 = scmp.lt.s32.totalorder %s17, 3
      %p172 = pnand %p170, %p171
      %p173 = pneg %p172
      // Predicated region
      $region25: #{tpu_custom_call.1} parent=5 // pred_check
        _
      $region26: #{tpu_custom_call.1} parent=5 // pred_check_branch
        %175 = sbr.rel (%p172) target = $region28
      $region27: #{tpu_custom_call.1} parent=5 // pred_region
        %s176 = ssub.s32 %s17, 1
        %s177 = sand.u32 %s44, 1
        %s178 = scalar_lea.sflag [#allocation3], %s177
        %s179 = sand.u32 %s44, 1
        %s180 = smul.addr %s179, 8
        %s181 = scalar_lea.vmem [#allocation2], %s180
        // Predicated region
        $region29: #{tpu_custom_call.1} parent=27 // pred_check
          %p182 = pneg %p57
        $region30: #{tpu_custom_call.1} parent=27 // pred_check_branch
          %184 = sbr.rel (%p182) target = $region32
        $region31: #{tpu_custom_call.1} parent=27 // pred_region
          %185 = dma.done %s178, 128
        $region32: #{tpu_custom_call.1} parent=27 // pred_fallthru
          _
        %s186 = sand.u32 %s72, 1
        %s187 = scalar_lea.sflag [#allocation6], %s186
        %s188 = sand.u32 %s72, 1
        %s189 = smul.addr %s188, 8
        %s190 = scalar_lea.vmem [#allocation5], %s189
        // Predicated region
        $region33: #{tpu_custom_call.1} parent=27 // pred_check
          %p191 = pneg %p85
        $region34: #{tpu_custom_call.1} parent=27 // pred_check_branch
          %193 = sbr.rel (%p191) target = $region36
        $region35: #{tpu_custom_call.1} parent=27 // pred_region
          %194 = dma.done %s187, 128
        $region36: #{tpu_custom_call.1} parent=27 // pred_fallthru
          _
        %s195 = sand.u32 %s44, 1
        %s196 = scalar_lea.sflag [#allocation3], %s195
        %s197 = sand.u32 %s44, 1
        %s198 = smul.addr %s197, 8
        %s199 = scalar_lea.vmem [#allocation2], %s198
        %p200 = pneg %p57
        %p201 = pneg %p54
        %s202 = sand.u32 %s72, 1
        %s203 = scalar_lea.sflag [#allocation6], %s202
        %s204 = sand.u32 %s72, 1
        %s205 = smul.addr %s204, 8
        %s206 = scalar_lea.vmem [#allocation5], %s205
        %p207 = pneg %p85
        %p208 = pneg %p82
        %p209 = pneg %p113
        %p210 = pneg %p110
        %s211 = sand.u32 %s100, 1
        %s212 = scalar_lea.sflag [#allocation4], %s211
        %s213 = sand.u32 %s100, 1
        %s214 = scalar_lea.vmem [#allocation7], %s213
        %v215 = vld [vmem:[%s181] sm:$0xff]
        %v216 = vld [vmem:[%s190] sm:$0xff]
        %v217 = vand.u32 2147483647, %v215
        %v218 = vsub.f32 0.0, %v217
        %v219 = vmul.f32 %v218, 1.442695
        %v220 = vpow.pop %v219
        %v221 = vmax.f32 %v215, 0.0
        %v222 = vmul.f32 %v215, %v216
        %v223 = vsub.f32 %v221, %v222
        %v224 = vadd.f32 %v220, 1.0
        %v225 = vlog2.pop %v224
        %v226 = vmul.f32 %v225, 0.6931472
        %v227 = vmul.f32 -0.5, %v220
        %v228 = vadd.f32 %v227, 1.0
        %v229 = vmul.f32 %v228, %v220
        %v230 = vand.u32 2147483647, %v220
        %vm231 = vcmp.lt.f32.partialorder %v230, 0.0004427343
        %v232 = vsel %vm231, %v229, %v226
        %v233 = vadd.f32 %v223, %v232
        %vm234 = vcmp.ge.f32.partialorder %v215, 0.0
        %v235 = vsel %vm234, 1.0, %v220
        %v236 = vadd.f32 %v220, 1.0
        %v237 = vrcp.pop %v236
        %v238 = vmul.f32 %v235, %v237
        %v239 = vadd.f32 %v216, %v238
        %v240 = vmul.f32 %v238, 2.0
        %v241 = vmul.f32 %v240, %v216
        %v242 = vsub.f32 %v239, %v241
        %v243 = vmul.f32 %v242, %v242
        %v244 = vmul.f32 %v216, %v243
        %v245 = vmul.f32 %v244, %v233
        %v246 = vrot.slane %v245, 4
        %v247 = vadd.f32 %v245, %v246
        %v248 = vrot.slane %v247, 2
        %v249 = vadd.f32 %v247, %v248
        %v250 = vrot.slane %v249, 1
        %v251 = vadd.f32 %v249, %v250
        %252 = vst [vmem:[%s214] sm:$0x1] %v251
        %s253 = sand.u32 %s100, 1
        %s254 = scalar_lea.sflag [#allocation4], %s253
        %s255 = sand.u32 %s100, 1
        %s256 = scalar_lea.vmem [#allocation7], %s255
        // Predicated region
        $region37: #{tpu_custom_call.1} parent=27 // pred_check
          %p257 = pneg %p110
        $region38: #{tpu_custom_call.1} parent=27 // pred_check_branch
          %259 = sbr.rel (%p257) target = $region40
        $region39: #{tpu_custom_call.1} parent=27 // pred_region
          %s261 = ssub.s32 16, 16
          %262 = vsyncadd %s254, %s261
          %s263 = sadd.s32 %s27, %s26
          %s264 = smul.addr %s263, 16
          %s265 = scalar_lea.hbm %s2, %s264
          %s267 = sshll.u32 %s256, 4
          %s268 = int_to_ptr.vmem [resolvable:$true] %s267
          %270 = dma.vmem_to_hbm [thread:$0]  %s268, 16, %s265, %s254
        $region40: #{tpu_custom_call.1} parent=27 // pred_fallthru
          _
      $region28: #{tpu_custom_call.1} parent=5 // pred_fallthru
        _
      %p271 = scmp.le.s32.totalorder 2, %s17
      // Predicated region
      $region41: #{tpu_custom_call.1} parent=5 // pred_check
        %p272 = pneg %p271
      $region42: #{tpu_custom_call.1} parent=5 // pred_check_branch
        %274 = sbr.rel (%p272) target = $region44
      $region43: #{tpu_custom_call.1} parent=5 // pred_region
        %s275 = ssub.s32 %s17, 2
        // Predicated region
        $region45: #{tpu_custom_call.1} parent=43 // pred_check
          %p276 = pneg %p116
        $region46: #{tpu_custom_call.1} parent=43 // pred_check_branch
          %278 = sbr.rel (%p276) target = $region48
        $region47: #{tpu_custom_call.1} parent=43 // pred_region
          %s279 = sand.u32 %s101, 1
          %s280 = scalar_lea.sflag [#allocation4], %s279
          %s281 = sand.u32 %s101, 1
          %s282 = scalar_lea.vmem [#allocation7], %s281
          %283 = dma.done %s280, 16
        $region48: #{tpu_custom_call.1} parent=43 // pred_fallthru
          _
      $region44: #{tpu_custom_call.1} parent=5 // pred_fallthru
        _
    $region6: #{tpu_custom_call.1} parent=1 // loop_footer
      %s21 = sadd.s32 1, %s17
    $region7: #{tpu_custom_call.1} parent=1 // loop_footer_branch
      %16 = sbr.rel target = $region3
    $region8: #{tpu_custom_call.1} parent=1 // loop_exit
      _
    %284 = vsyncpa [#allocation3], 1
    %s285 = scalar_lea.sflag [#allocation3], 1
    %286 = vsyncpa %s285, 1
    %287 = vsyncpa [#allocation6], 1
    %s288 = scalar_lea.sflag [#allocation6], 1
    %289 = vsyncpa %s288, 1
    %290 = vsyncpa [#allocation4], 1
    %s291 = scalar_lea.sflag [#allocation4], 1
    %292 = vsyncpa %s291, 1

</llo_original>
